<compile_context>
chip_gen: v5e
topology: v5e:2x2
jax: 0.10.0
libtpu: 0.0.40
codegen_flags: <defaults>
</compile_context>

<pallas_src>
import jax
import jax.numpy as jnp
from jax.experimental import pallas as pl
from jax.experimental.pallas import tpu as pltpu


def _complex_mix_kernel(x_ref, w_ref, o_ref):
    """out[b, o, m] = sum_i x[b, i, m] * w[i, o, m]  (complex, per mode).

    Real/imag planes are packed along the leading axis of every operand.
    Block shapes:
      x_ref : (2, Bt, Cin,  Mt)
      w_ref : (2, Cin, Cout, Mt)
      o_ref : (2, Bt, Cout, Mt)
    """
    xr = x_ref[0]                       # (Bt, Cin, Mt)
    xi = x_ref[1]
    wr = w_ref[0]                       # (Cin, Cout, Mt)
    wi = w_ref[1]

    bt, cin, mt = xr.shape
    cout = wr.shape[1]

    acc_r = jnp.zeros((bt, cout, mt), jnp.float32)
    acc_i = jnp.zeros((bt, cout, mt), jnp.float32)

    # Accumulating reduction over input channels.  Cin is a static Python int,
    # so this fully unrolls with zero-cost static slices; only the two
    # output-sized accumulators stay live (no (Cin, Cout, Mt) temporaries).
    for i in range(cin):
        xri = xr[:, i, :][:, None, :]   # (Bt, 1, Mt)
        xii = xi[:, i, :][:, None, :]
        wri = wr[i][None, :, :]         # (1, Cout, Mt)
        wii = wi[i][None, :, :]
        acc_r = acc_r + xri * wri - xii * wii
        acc_i = acc_i + xri * wii + xii * wri

    o_ref[0] = acc_r
    o_ref[1] = acc_i


def _pick_mode_tile(mp):
    """Largest 128-multiple tile (<= 1024) that divides the padded mode axis."""
    for cand in (1024, 512, 256, 128):
        if cand <= mp and mp % cand == 0:
            return cand
    return mp


def _complex_mix(x_ri, w_ri):
    """Pallas-backed complex channel mix.

    x_ri : (2, B, Cin, Mp)  f32   (real/imag planes, Mp a 128-multiple)
    w_ri : (2, Cin, Cout, Mp) f32
    returns (2, B, Cout, Mp) f32
    """
    _, B, Cin, Mp = x_ri.shape
    Cout = w_ri.shape[2]

    bt = B if B <= 8 else 8
    mt = _pick_mode_tile(Mp)
    grid = (pl.cdiv(B, bt), Mp // mt)

    x_spec = pl.BlockSpec((2, bt, Cin, mt), lambda b, m: (0, b, 0, m))
    w_spec = pl.BlockSpec((2, Cin, Cout, mt), lambda b, m: (0, 0, 0, m))
    o_spec = pl.BlockSpec((2, bt, Cout, mt), lambda b, m: (0, b, 0, m))

    # Explicit VMEM budget: ~double-buffered blocks + slack, capped under the
    # v7x 64 MiB physical ceiling (floor at the 16 MiB v5e scoped default).
    block_bytes = 4 * (2 * bt * Cin * mt + 2 * Cin * Cout * mt
                       + 2 * bt * Cout * mt)
    vmem_limit = int(min(64 * 1024 * 1024,
                         max(16 * 1024 * 1024, 4 * block_bytes)))

    return pl.pallas_call(
        _complex_mix_kernel,
        out_shape=jax.ShapeDtypeStruct((2, B, Cout, Mp), jnp.float32),
        grid=grid,
        in_specs=[x_spec, w_spec],
        out_specs=o_spec,
        compiler_params=pltpu.CompilerParams(
            dimension_semantics=("parallel", "parallel"),
            vmem_limit_bytes=vmem_limit,
        ),
    )(x_ri, w_ri)


def spectral_conv2d(x, weights1, weights2, modes1, modes2):
    """Forward pass matching the PyTorch SpectralConv2d module.

    x        : (B, Cin, H, W) float32
    weights1 : (Cin, Cout, modes1, modes2, 2) float32  (real/imag last dim)
    weights2 : (Cin, Cout, modes1, modes2, 2) float32
    returns  : (B, Cout, H, W) float32
    """
    B, Cin, H, W = x.shape
    Cout = weights1.shape[1]
    Wf = W // 2 + 1
    M = modes1 * modes2
    M2 = 2 * M                                  # both corners fused
    Mp = ((M2 + 127) // 128) * 128              # lane-dense (128-multiple)

    # TODO(synk): rfft2 / irfft2 have no Pallas primitive on TPU; plain JAX FFT.
    x_ft = jnp.fft.rfft2(x)                                  # (B, Cin, H, Wf)

    # Gather both retained-mode corners onto one flat mode axis.
    x_top = x_ft[:, :, :modes1, :modes2].reshape(B, Cin, M)
    x_bot = x_ft[:, :, H - modes1:, :modes2].reshape(B, Cin, M)
    x_modes = jnp.concatenate([x_top, x_bot], axis=-1)       # (B, Cin, 2M) c64

    x_ri = jnp.stack([jnp.real(x_modes), jnp.imag(x_modes)],
                     axis=0).astype(jnp.float32)             # (2, B, Cin, 2M)
    x_ri = jnp.pad(x_ri, ((0, 0), (0, 0), (0, 0), (0, Mp - M2)))

    w_cat = jnp.concatenate(
        [weights1.reshape(Cin, Cout, M, 2),
         weights2.reshape(Cin, Cout, M, 2)], axis=2)          # (Cin,Cout,2M,2)
    w_ri = jnp.moveaxis(w_cat, -1, 0).astype(jnp.float32)     # (2,Cin,Cout,2M)
    w_ri = jnp.pad(w_ri, ((0, 0), (0, 0), (0, 0), (0, Mp - M2)))

    o_ri = _complex_mix(x_ri, w_ri)                           # (2, B, Cout, Mp)

    out_c = jax.lax.complex(o_ri[0, :, :, :M2], o_ri[1, :, :, :M2])
    out_top = out_c[..., :M].reshape(B, Cout, modes1, modes2)
    out_bot = out_c[..., M:].reshape(B, Cout, modes1, modes2)

    out_ft = jnp.zeros((B, Cout, H, Wf), dtype=jnp.complex64)
    out_ft = out_ft.at[:, :, :modes1, :modes2].set(out_top)
    out_ft = out_ft.at[:, :, H - modes1:, :modes2].set(out_bot)

    return jnp.fft.irfft2(out_ft, s=(H, W)).astype(jnp.float32)


def spectral_conv2d_ref(x, weights1, weights2, modes1, modes2):
    """Pure-JAX reference (mirrors the PyTorch forward exactly)."""
    B, Cin, H, W = x.shape
    Cout = weights1.shape[1]
    Wf = W // 2 + 1
    x_ft = jnp.fft.rfft2(x)
    w1 = jax.lax.complex(weights1[..., 0], weights1[..., 1])
    w2 = jax.lax.complex(weights2[..., 0], weights2[..., 1])
    out_ft = jnp.zeros((B, Cout, H, Wf), dtype=jnp.complex64)
    out_ft = out_ft.at[:, :, :modes1, :modes2].set(
        jnp.einsum('bixy,ioxy->boxy', x_ft[:, :, :modes1, :modes2], w1))
    out_ft = out_ft.at[:, :, H - modes1:, :modes2].set(
        jnp.einsum('bixy,ioxy->boxy', x_ft[:, :, H - modes1:, :modes2], w2))
    return jnp.fft.irfft2(out_ft, s=(H, W)).astype(jnp.float32)


if __name__ == "__main__":
    # Small, deterministic config
    B, Cin, Cout = 2, 4, 4
    H = W = 16
    modes1 = modes2 = 4

    key = jax.random.PRNGKey(0)
    kx, k1, k2 = jax.random.split(key, 3)

    scale = 1.0 / (Cin * Cout)
    x = jax.random.normal(kx, (B, Cin, H, W), dtype=jnp.float32)
    weights1 = scale * jax.random.normal(
        k1, (Cin, Cout, modes1, modes2, 2), dtype=jnp.float32)
    weights2 = scale * jax.random.normal(
        k2, (Cin, Cout, modes1, modes2, 2), dtype=jnp.float32)

    out = spectral_conv2d(x, weights1, weights2, modes1, modes2)
    out = jax.block_until_ready(out)

    ref = spectral_conv2d_ref(x, weights1, weights2, modes1, modes2)
    ref = jax.block_until_ready(ref)

    assert out.shape == (B, Cout, H, W), out.shape
    assert jnp.allclose(out, ref, rtol=1e-3, atol=1e-5), float(
        jnp.max(jnp.abs(out - ref)))

    print("KERNEL_OK")
</pallas_src>

<mosaic_0001>
module attributes {stable_mosaic.version = 11 : i64} {
  func.func @_complex_mix_kernel(%arg0: i32, %arg1: i32, %arg2: memref<2x2x4x128xf32, #tpu.memory_space<vmem>>, %arg3: memref<2x4x4x128xf32, #tpu.memory_space<vmem>>, %arg4: memref<2x2x4x128xf32, #tpu.memory_space<vmem>>) attributes {dimension_semantics = [#tpu.dimension_semantics<parallel>, #tpu.dimension_semantics<parallel>], iteration_bounds = array<i64: 1, 1>, scalar_prefetch = 0 : i64, scratch_operands = 0 : i64, tpu.core_type = #tpu.core_type<tc>, window_params = [{transform_indices = @transform_0, window_bounds = array<i64: 2, 2, 4, 128>}, {transform_indices = @transform_1, window_bounds = array<i64: 2, 4, 4, 128>}, {transform_indices = @transform_2, window_bounds = array<i64: 2, 2, 4, 128>}]} {
    %c0 = arith.constant 0 : index
    %c0_0 = arith.constant 0 : index
    %c0_1 = arith.constant 0 : index
    %c0_2 = arith.constant 0 : index
    %0 = vector.load %arg2[%c0, %c0_0, %c0_1, %c0_2] : memref<2x2x4x128xf32, #tpu.memory_space<vmem>>, vector<1x2x4x128xf32>
    %1 = vector.shape_cast %0 : vector<1x2x4x128xf32> to vector<2x4x128xf32>
    %c1 = arith.constant 1 : index
    %c0_3 = arith.constant 0 : index
    %c0_4 = arith.constant 0 : index
    %c0_5 = arith.constant 0 : index
    %2 = vector.load %arg2[%c1, %c0_3, %c0_4, %c0_5] : memref<2x2x4x128xf32, #tpu.memory_space<vmem>>, vector<1x2x4x128xf32>
    %3 = vector.shape_cast %2 : vector<1x2x4x128xf32> to vector<2x4x128xf32>
    %c0_6 = arith.constant 0 : index
    %c0_7 = arith.constant 0 : index
    %c0_8 = arith.constant 0 : index
    %c0_9 = arith.constant 0 : index
    %4 = vector.load %arg3[%c0_6, %c0_7, %c0_8, %c0_9] : memref<2x4x4x128xf32, #tpu.memory_space<vmem>>, vector<1x4x4x128xf32>
    %5 = vector.shape_cast %4 : vector<1x4x4x128xf32> to vector<4x4x128xf32>
    %c1_10 = arith.constant 1 : index
    %c0_11 = arith.constant 0 : index
    %c0_12 = arith.constant 0 : index
    %c0_13 = arith.constant 0 : index
    %6 = vector.load %arg3[%c1_10, %c0_11, %c0_12, %c0_13] : memref<2x4x4x128xf32, #tpu.memory_space<vmem>>, vector<1x4x4x128xf32>
    %7 = vector.shape_cast %6 : vector<1x4x4x128xf32> to vector<4x4x128xf32>
    %cst = arith.constant 0.000000e+00 : f32
    %8 = vector.broadcast %cst : f32 to vector<2x4x128xf32>
    %cst_14 = arith.constant 0.000000e+00 : f32
    %9 = vector.broadcast %cst_14 : f32 to vector<2x4x128xf32>
    %10 = vector.extract_strided_slice %1 {offsets = [0, 0, 0], sizes = [2, 1, 128], strides = [1, 1, 1]} : vector<2x4x128xf32> to vector<2x1x128xf32>
    %11 = vector.shape_cast %10 : vector<2x1x128xf32> to vector<2x128xf32>
    %12 = vector.shape_cast %11 : vector<2x128xf32> to vector<2x1x128xf32>
    %13 = vector.extract_strided_slice %3 {offsets = [0, 0, 0], sizes = [2, 1, 128], strides = [1, 1, 1]} : vector<2x4x128xf32> to vector<2x1x128xf32>
    %14 = vector.shape_cast %13 : vector<2x1x128xf32> to vector<2x128xf32>
    %15 = vector.shape_cast %14 : vector<2x128xf32> to vector<2x1x128xf32>
    %16 = vector.extract_strided_slice %5 {offsets = [0, 0, 0], sizes = [1, 4, 128], strides = [1, 1, 1]} : vector<4x4x128xf32> to vector<1x4x128xf32>
    %17 = vector.shape_cast %16 : vector<1x4x128xf32> to vector<4x128xf32>
    %18 = vector.shape_cast %17 : vector<4x128xf32> to vector<1x4x128xf32>
    %19 = vector.extract_strided_slice %7 {offsets = [0, 0, 0], sizes = [1, 4, 128], strides = [1, 1, 1]} : vector<4x4x128xf32> to vector<1x4x128xf32>
    %20 = vector.shape_cast %19 : vector<1x4x128xf32> to vector<4x128xf32>
    %21 = vector.shape_cast %20 : vector<4x128xf32> to vector<1x4x128xf32>
    %22 = vector.broadcast %12 : vector<2x1x128xf32> to vector<2x4x128xf32>
    %23 = vector.broadcast %18 : vector<1x4x128xf32> to vector<2x4x128xf32>
    %24 = arith.mulf %22, %23 : vector<2x4x128xf32>
    %25 = arith.addf %8, %24 : vector<2x4x128xf32>
    %26 = vector.broadcast %15 : vector<2x1x128xf32> to vector<2x4x128xf32>
    %27 = vector.broadcast %21 : vector<1x4x128xf32> to vector<2x4x128xf32>
    %28 = arith.mulf %26, %27 : vector<2x4x128xf32>
    %29 = arith.subf %25, %28 : vector<2x4x128xf32>
    %30 = vector.broadcast %12 : vector<2x1x128xf32> to vector<2x4x128xf32>
    %31 = vector.broadcast %21 : vector<1x4x128xf32> to vector<2x4x128xf32>
    %32 = arith.mulf %30, %31 : vector<2x4x128xf32>
    %33 = arith.addf %9, %32 : vector<2x4x128xf32>
    %34 = vector.broadcast %15 : vector<2x1x128xf32> to vector<2x4x128xf32>
    %35 = vector.broadcast %18 : vector<1x4x128xf32> to vector<2x4x128xf32>
    %36 = arith.mulf %34, %35 : vector<2x4x128xf32>
    %37 = arith.addf %33, %36 : vector<2x4x128xf32>
    %38 = vector.extract_strided_slice %1 {offsets = [0, 1, 0], sizes = [2, 1, 128], strides = [1, 1, 1]} : vector<2x4x128xf32> to vector<2x1x128xf32>
    %39 = vector.shape_cast %38 : vector<2x1x128xf32> to vector<2x128xf32>
    %40 = vector.shape_cast %39 : vector<2x128xf32> to vector<2x1x128xf32>
    %41 = vector.extract_strided_slice %3 {offsets = [0, 1, 0], sizes = [2, 1, 128], strides = [1, 1, 1]} : vector<2x4x128xf32> to vector<2x1x128xf32>
    %42 = vector.shape_cast %41 : vector<2x1x128xf32> to vector<2x128xf32>
    %43 = vector.shape_cast %42 : vector<2x128xf32> to vector<2x1x128xf32>
    %44 = vector.extract_strided_slice %5 {offsets = [1, 0, 0], sizes = [1, 4, 128], strides = [1, 1, 1]} : vector<4x4x128xf32> to vector<1x4x128xf32>
    %45 = vector.shape_cast %44 : vector<1x4x128xf32> to vector<4x128xf32>
    %46 = vector.shape_cast %45 : vector<4x128xf32> to vector<1x4x128xf32>
    %47 = vector.extract_strided_slice %7 {offsets = [1, 0, 0], sizes = [1, 4, 128], strides = [1, 1, 1]} : vector<4x4x128xf32> to vector<1x4x128xf32>
    %48 = vector.shape_cast %47 : vector<1x4x128xf32> to vector<4x128xf32>
    %49 = vector.shape_cast %48 : vector<4x128xf32> to vector<1x4x128xf32>
    %50 = vector.broadcast %40 : vector<2x1x128xf32> to vector<2x4x128xf32>
    %51 = vector.broadcast %46 : vector<1x4x128xf32> to vector<2x4x128xf32>
    %52 = arith.mulf %50, %51 : vector<2x4x128xf32>
    %53 = arith.addf %29, %52 : vector<2x4x128xf32>
    %54 = vector.broadcast %43 : vector<2x1x128xf32> to vector<2x4x128xf32>
    %55 = vector.broadcast %49 : vector<1x4x128xf32> to vector<2x4x128xf32>
    %56 = arith.mulf %54, %55 : vector<2x4x128xf32>
    %57 = arith.subf %53, %56 : vector<2x4x128xf32>
    %58 = vector.broadcast %40 : vector<2x1x128xf32> to vector<2x4x128xf32>
    %59 = vector.broadcast %49 : vector<1x4x128xf32> to vector<2x4x128xf32>
    %60 = arith.mulf %58, %59 : vector<2x4x128xf32>
    %61 = arith.addf %37, %60 : vector<2x4x128xf32>
    %62 = vector.broadcast %43 : vector<2x1x128xf32> to vector<2x4x128xf32>
    %63 = vector.broadcast %46 : vector<1x4x128xf32> to vector<2x4x128xf32>
    %64 = arith.mulf %62, %63 : vector<2x4x128xf32>
    %65 = arith.addf %61, %64 : vector<2x4x128xf32>
    %66 = vector.extract_strided_slice %1 {offsets = [0, 2, 0], sizes = [2, 1, 128], strides = [1, 1, 1]} : vector<2x4x128xf32> to vector<2x1x128xf32>
    %67 = vector.shape_cast %66 : vector<2x1x128xf32> to vector<2x128xf32>
    %68 = vector.shape_cast %67 : vector<2x128xf32> to vector<2x1x128xf32>
    %69 = vector.extract_strided_slice %3 {offsets = [0, 2, 0], sizes = [2, 1, 128], strides = [1, 1, 1]} : vector<2x4x128xf32> to vector<2x1x128xf32>
    %70 = vector.shape_cast %69 : vector<2x1x128xf32> to vector<2x128xf32>
    %71 = vector.shape_cast %70 : vector<2x128xf32> to vector<2x1x128xf32>
    %72 = vector.extract_strided_slice %5 {offsets = [2, 0, 0], sizes = [1, 4, 128], strides = [1, 1, 1]} : vector<4x4x128xf32> to vector<1x4x128xf32>
    %73 = vector.shape_cast %72 : vector<1x4x128xf32> to vector<4x128xf32>
    %74 = vector.shape_cast %73 : vector<4x128xf32> to vector<1x4x128xf32>
    %75 = vector.extract_strided_slice %7 {offsets = [2, 0, 0], sizes = [1, 4, 128], strides = [1, 1, 1]} : vector<4x4x128xf32> to vector<1x4x128xf32>
    %76 = vector.shape_cast %75 : vector<1x4x128xf32> to vector<4x128xf32>
    %77 = vector.shape_cast %76 : vector<4x128xf32> to vector<1x4x128xf32>
    %78 = vector.broadcast %68 : vector<2x1x128xf32> to vector<2x4x128xf32>
    %79 = vector.broadcast %74 : vector<1x4x128xf32> to vector<2x4x128xf32>
    %80 = arith.mulf %78, %79 : vector<2x4x128xf32>
    %81 = arith.addf %57, %80 : vector<2x4x128xf32>
    %82 = vector.broadcast %71 : vector<2x1x128xf32> to vector<2x4x128xf32>
    %83 = vector.broadcast %77 : vector<1x4x128xf32> to vector<2x4x128xf32>
    %84 = arith.mulf %82, %83 : vector<2x4x128xf32>
    %85 = arith.subf %81, %84 : vector<2x4x128xf32>
    %86 = vector.broadcast %68 : vector<2x1x128xf32> to vector<2x4x128xf32>
    %87 = vector.broadcast %77 : vector<1x4x128xf32> to vector<2x4x128xf32>
    %88 = arith.mulf %86, %87 : vector<2x4x128xf32>
    %89 = arith.addf %65, %88 : vector<2x4x128xf32>
    %90 = vector.broadcast %71 : vector<2x1x128xf32> to vector<2x4x128xf32>
    %91 = vector.broadcast %74 : vector<1x4x128xf32> to vector<2x4x128xf32>
    %92 = arith.mulf %90, %91 : vector<2x4x128xf32>
    %93 = arith.addf %89, %92 : vector<2x4x128xf32>
    %94 = vector.extract_strided_slice %1 {offsets = [0, 3, 0], sizes = [2, 1, 128], strides = [1, 1, 1]} : vector<2x4x128xf32> to vector<2x1x128xf32>
    %95 = vector.shape_cast %94 : vector<2x1x128xf32> to vector<2x128xf32>
    %96 = vector.shape_cast %95 : vector<2x128xf32> to vector<2x1x128xf32>
    %97 = vector.extract_strided_slice %3 {offsets = [0, 3, 0], sizes = [2, 1, 128], strides = [1, 1, 1]} : vector<2x4x128xf32> to vector<2x1x128xf32>
    %98 = vector.shape_cast %97 : vector<2x1x128xf32> to vector<2x128xf32>
    %99 = vector.shape_cast %98 : vector<2x128xf32> to vector<2x1x128xf32>
    %100 = vector.extract_strided_slice %5 {offsets = [3, 0, 0], sizes = [1, 4, 128], strides = [1, 1, 1]} : vector<4x4x128xf32> to vector<1x4x128xf32>
    %101 = vector.shape_cast %100 : vector<1x4x128xf32> to vector<4x128xf32>
    %102 = vector.shape_cast %101 : vector<4x128xf32> to vector<1x4x128xf32>
    %103 = vector.extract_strided_slice %7 {offsets = [3, 0, 0], sizes = [1, 4, 128], strides = [1, 1, 1]} : vector<4x4x128xf32> to vector<1x4x128xf32>
    %104 = vector.shape_cast %103 : vector<1x4x128xf32> to vector<4x128xf32>
    %105 = vector.shape_cast %104 : vector<4x128xf32> to vector<1x4x128xf32>
    %106 = vector.broadcast %96 : vector<2x1x128xf32> to vector<2x4x128xf32>
    %107 = vector.broadcast %102 : vector<1x4x128xf32> to vector<2x4x128xf32>
    %108 = arith.mulf %106, %107 : vector<2x4x128xf32>
    %109 = arith.addf %85, %108 : vector<2x4x128xf32>
    %110 = vector.broadcast %99 : vector<2x1x128xf32> to vector<2x4x128xf32>
    %111 = vector.broadcast %105 : vector<1x4x128xf32> to vector<2x4x128xf32>
    %112 = arith.mulf %110, %111 : vector<2x4x128xf32>
    %113 = arith.subf %109, %112 : vector<2x4x128xf32>
    %114 = vector.broadcast %96 : vector<2x1x128xf32> to vector<2x4x128xf32>
    %115 = vector.broadcast %105 : vector<1x4x128xf32> to vector<2x4x128xf32>
    %116 = arith.mulf %114, %115 : vector<2x4x128xf32>
    %117 = arith.addf %93, %116 : vector<2x4x128xf32>
    %118 = vector.broadcast %99 : vector<2x1x128xf32> to vector<2x4x128xf32>
    %119 = vector.broadcast %102 : vector<1x4x128xf32> to vector<2x4x128xf32>
    %120 = arith.mulf %118, %119 : vector<2x4x128xf32>
    %121 = arith.addf %117, %120 : vector<2x4x128xf32>
    %c0_15 = arith.constant 0 : index
    %c0_16 = arith.constant 0 : index
    %c0_17 = arith.constant 0 : index
    %c0_18 = arith.constant 0 : index
    %122 = vector.load %arg4[%c0_15, %c0_16, %c0_17, %c0_18] : memref<2x2x4x128xf32, #tpu.memory_space<vmem>>, vector<1x2x4x128xf32>
    %123 = vector.shape_cast %122 : vector<1x2x4x128xf32> to vector<2x4x128xf32>
    %124 = vector.shape_cast %113 : vector<2x4x128xf32> to vector<1x2x4x128xf32>
    tpu.vector_store %arg4[%c0_15, %c0_16, %c0_17, %c0_18], %124 {strides = array<i32>} : memref<2x2x4x128xf32, #tpu.memory_space<vmem>>, vector<1x2x4x128xf32>,
    %c1_19 = arith.constant 1 : index
    %c0_20 = arith.constant 0 : index
    %c0_21 = arith.constant 0 : index
    %c0_22 = arith.constant 0 : index
    %125 = vector.load %arg4[%c1_19, %c0_20, %c0_21, %c0_22] : memref<2x2x4x128xf32, #tpu.memory_space<vmem>>, vector<1x2x4x128xf32>
    %126 = vector.shape_cast %125 : vector<1x2x4x128xf32> to vector<2x4x128xf32>
    %127 = vector.shape_cast %121 : vector<2x4x128xf32> to vector<1x2x4x128xf32>
    tpu.vector_store %arg4[%c1_19, %c0_20, %c0_21, %c0_22], %127 {strides = array<i32>} : memref<2x2x4x128xf32, #tpu.memory_space<vmem>>, vector<1x2x4x128xf32>,
    return
  }
  func.func @transform_0(%arg0: i32, %arg1: i32) -> (i32, i32, i32, i32) {
    %c0_i32 = arith.constant 0 : i32
    %c0_i32_0 = arith.constant 0 : i32
    %c0_i32_1 = arith.constant 0 : i32
    return %c0_i32, %arg0, %c0_i32_0, %arg1 : i32, i32, i32, i32
  }
  func.func @transform_1(%arg0: i32, %arg1: i32) -> (i32, i32, i32, i32) {
    %c0_i32 = arith.constant 0 : i32
    %c0_i32_0 = arith.constant 0 : i32
    %c0_i32_1 = arith.constant 0 : i32
    %c0_i32_2 = arith.constant 0 : i32
    return %c0_i32, %c0_i32_0, %c0_i32_1, %arg1 : i32, i32, i32, i32
  }
  func.func @transform_2(%arg0: i32, %arg1: i32) -> (i32, i32, i32, i32) {
    %c0_i32 = arith.constant 0 : i32
    %c0_i32_0 = arith.constant 0 : i32
    %c0_i32_1 = arith.constant 0 : i32
    return %c0_i32, %arg0, %c0_i32_0, %arg1 : i32, i32, i32, i32
  }
}

</mosaic_0001>

<llo_original>
// kernel: tpu_custom_call.1
$region0: #{tpu_custom_call.1}
  #allocation0 [shape = 'u32[]', space=smem, size = 0x4, offset = 0x4, fixed_abs, tag = 'smem constant byte address 0x4 - core index']
  #allocation1 [shape = 'u32[72,128]{1,0:T(1,128)}', space=vmem, size = 0x9000, scoped, tag = 'internal scratch']
  %s0 = inlined_call_operand.hbm [shape: f32[2,2,4,128], index: 0, kind: input, shape index: {}]
  %s1 = inlined_call_operand.hbm [shape: f32[2,4,4,128], index: 1, kind: input, shape index: {}]
  %s2 = inlined_call_operand.hbm [shape: f32[2,2,4,128], index: 2, kind: output, shape index: {}]
  %s3 = sld [smem:[#allocation0]]
  $region26: #{tpu_custom_call.1} parent=0
    _
  %s5 = ssub.s32 1, %s3
  %s6 = scalar_select 0, %s5, %s3
  $region1: #{tpu_custom_call.1} parent=0
    #allocation2 [shape = 'u8[8192]{0}', space=vmem, size = 0x2000, scoped, tag = 'input window, operand 0, single buffered']
    #allocation3 [shape = 's32[1]{0}', space=sflag, size = 0x4, scoped, tag = 'scoped memory for tpu_custom_call.1']
    #allocation4 [shape = 's32[1]{0}', space=sflag, size = 0x4, scoped, tag = 'scoped memory for tpu_custom_call.1']
    #allocation5 [shape = 'u8[16384]{0}', space=vmem, size = 0x4000, scoped, tag = 'input window, operand 1, single buffered']
    #allocation6 [shape = 's32[1]{0}', space=sflag, size = 0x4, scoped, tag = 'scoped memory for tpu_custom_call.1']
    #allocation7 [shape = 'u8[8192]{0}', space=vmem, size = 0x2000, scoped, tag = 'output window, operand 0, single buffered']
    %7 = vsyncpa [#allocation3], 0
    %8 = vsyncpa [#allocation6], 0
    %9 = vsyncpa [#allocation4], 0
    // Predicated region
    $region2: #{tpu_custom_call.1} parent=1 // pred_check
      _
    $region3: #{tpu_custom_call.1} parent=1 // pred_check_branch
      %11 = sbr.rel (0) target = $region5
    $region4: #{tpu_custom_call.1} parent=1 // pred_region
      %13 = vsyncadd [#allocation3], 0
      %s14 = sshll.u32 %s0, 4
      %s15 = int_to_ptr.hbm [resolvable:$true] %s14
      %s16 = sshll.u32 [#allocation2], 4
      %s17 = int_to_ptr.vmem [resolvable:$true] %s16
      %22 = dma.hbm_to_vmem [thread:$0]  %s15, 256, %s17, [#allocation3], 64, 64, 4
    $region5: #{tpu_custom_call.1} parent=1 // pred_fallthru
      _
    // Predicated region
    $region6: #{tpu_custom_call.1} parent=1 // pred_check
      _
    $region7: #{tpu_custom_call.1} parent=1 // pred_check_branch
      %24 = sbr.rel (0) target = $region9
    $region8: #{tpu_custom_call.1} parent=1 // pred_region
      %26 = vsyncadd [#allocation6], 0
      %s27 = sshll.u32 %s1, 4
      %s28 = int_to_ptr.hbm [resolvable:$true] %s27
      %s29 = sshll.u32 [#allocation5], 4
      %s30 = int_to_ptr.vmem [resolvable:$true] %s29
      %35 = dma.hbm_to_vmem [thread:$0]  %s28, 512, %s30, [#allocation6], 64, 64, 4
    $region9: #{tpu_custom_call.1} parent=1 // pred_fallthru
      _
    // Predicated region
    $region10: #{tpu_custom_call.1} parent=1 // pred_check
      _
    $region11: #{tpu_custom_call.1} parent=1 // pred_check_branch
      %37 = sbr.rel (0) target = $region13
    $region12: #{tpu_custom_call.1} parent=1 // pred_region
      %39 = dma.done [#allocation3], 256
    $region13: #{tpu_custom_call.1} parent=1 // pred_fallthru
      _
    // Predicated region
    $region14: #{tpu_custom_call.1} parent=1 // pred_check
      _
    $region15: #{tpu_custom_call.1} parent=1 // pred_check_branch
      %41 = sbr.rel (0) target = $region17
    $region16: #{tpu_custom_call.1} parent=1 // pred_region
      %43 = dma.done [#allocation6], 512
    $region17: #{tpu_custom_call.1} parent=1 // pred_fallthru
      _
    %v44 = vld [vmem:[#allocation2] sm:$0xf]
    %v45 = vld [vmem:[#allocation2 + $0x4] sm:$0xf]
    %s46 = scalar_lea.vmem [#allocation2], 8
    %v47 = vld [vmem:[%s46] sm:$0xf]
    %v48 = vld [vmem:[%s46 + $0x4] sm:$0xf]
    %v49 = vld [vmem:[#allocation5] sm:$0xf]
    %v50 = vld [vmem:[#allocation5 + $0x4] sm:$0xf]
    %v51 = vld [vmem:[#allocation5 + $0x8] sm:$0xf]
    %v52 = vld [vmem:[#allocation5 + $0xc] sm:$0xf]
    %s53 = scalar_lea.vmem [#allocation5], 16
    %v54 = vld [vmem:[%s53] sm:$0xf]
    %v55 = vld [vmem:[%s53 + $0x4] sm:$0xf]
    %v56 = vld [vmem:[%s53 + $0x8] sm:$0xf]
    %v57 = vld [vmem:[%s53 + $0xc] sm:$0xf]
    %v58 = vperm.slane %v44, 0
    %v59 = vperm.slane %v45, 0
    %v60 = vmul.f32 %v58, %v49
    %v61 = vmul.f32 %v59, %v49
    %v62 = vadd.f32 %v60, 0.0
    %v63 = vadd.f32 %v61, 0.0
    %v64 = vperm.slane %v47, 0
    %v65 = vperm.slane %v48, 0
    %v66 = vmul.f32 %v64, %v54
    %v67 = vmul.f32 %v65, %v54
    %v68 = vsub.f32 %v62, %v66
    %v69 = vsub.f32 %v63, %v67
    %v70 = vmul.f32 %v58, %v54
    %v71 = vmul.f32 %v59, %v54
    %v72 = vadd.f32 %v70, 0.0
    %v73 = vadd.f32 %v71, 0.0
    %v74 = vmul.f32 %v64, %v49
    %v75 = vmul.f32 %v65, %v49
    %v76 = vadd.f32 %v72, %v74
    %v77 = vadd.f32 %v73, %v75
    %v78 = vperm.slane %v44, 1
    %v79 = vperm.slane %v45, 1
    %v80 = vmul.f32 %v78, %v50
    %v81 = vmul.f32 %v79, %v50
    %v82 = vadd.f32 %v68, %v80
    %v83 = vadd.f32 %v69, %v81
    %v84 = vperm.slane %v47, 1
    %v85 = vperm.slane %v48, 1
    %v86 = vmul.f32 %v84, %v55
    %v87 = vmul.f32 %v85, %v55
    %v88 = vsub.f32 %v82, %v86
    %v89 = vsub.f32 %v83, %v87
    %v90 = vmul.f32 %v78, %v55
    %v91 = vmul.f32 %v79, %v55
    %v92 = vadd.f32 %v76, %v90
    %v93 = vadd.f32 %v77, %v91
    %v94 = vmul.f32 %v84, %v50
    %v95 = vmul.f32 %v85, %v50
    %v96 = vadd.f32 %v92, %v94
    %v97 = vadd.f32 %v93, %v95
    %v98 = vperm.slane %v44, 2
    %v99 = vperm.slane %v45, 2
    %v100 = vmul.f32 %v98, %v51
    %v101 = vmul.f32 %v99, %v51
    %v102 = vadd.f32 %v88, %v100
    %v103 = vadd.f32 %v89, %v101
    %v104 = vperm.slane %v47, 2
    %v105 = vperm.slane %v48, 2
    %v106 = vmul.f32 %v104, %v56
    %v107 = vmul.f32 %v105, %v56
    %v108 = vsub.f32 %v102, %v106
    %v109 = vsub.f32 %v103, %v107
    %v110 = vmul.f32 %v98, %v56
    %v111 = vmul.f32 %v99, %v56
    %v112 = vadd.f32 %v96, %v110
    %v113 = vadd.f32 %v97, %v111
    %v114 = vmul.f32 %v104, %v51
    %v115 = vmul.f32 %v105, %v51
    %v116 = vadd.f32 %v112, %v114
    %v117 = vadd.f32 %v113, %v115
    %v118 = vperm.slane %v44, 3
    %v119 = vperm.slane %v45, 3
    %v120 = vmul.f32 %v118, %v52
    %v121 = vmul.f32 %v119, %v52
    %v122 = vadd.f32 %v108, %v120
    %v123 = vadd.f32 %v109, %v121
    %v124 = vperm.slane %v47, 3
    %v125 = vperm.slane %v48, 3
    %v126 = vmul.f32 %v124, %v57
    %v127 = vmul.f32 %v125, %v57
    %v128 = vsub.f32 %v122, %v126
    %v129 = vsub.f32 %v123, %v127
    %v130 = vmul.f32 %v118, %v57
    %v131 = vmul.f32 %v119, %v57
    %v132 = vadd.f32 %v116, %v130
    %v133 = vadd.f32 %v117, %v131
    %v134 = vmul.f32 %v124, %v52
    %v135 = vmul.f32 %v125, %v52
    %v136 = vadd.f32 %v132, %v134
    %v137 = vadd.f32 %v133, %v135
    %138 = vst [vmem:[#allocation7] sm:$0xf] %v128
    %139 = vst [vmem:[#allocation7 + $0x4] sm:$0xf] %v129
    %s140 = scalar_lea.vmem [#allocation7], 8
    %141 = vst [vmem:[%s140] sm:$0xf] %v136
    %142 = vst [vmem:[%s140 + $0x4] sm:$0xf] %v137
    // Predicated region
    $region18: #{tpu_custom_call.1} parent=1 // pred_check
      _
    $region19: #{tpu_custom_call.1} parent=1 // pred_check_branch
      %144 = sbr.rel (0) target = $region21
    $region20: #{tpu_custom_call.1} parent=1 // pred_region
      %146 = vsyncadd [#allocation4], 0
      %s147 = sshll.u32 [#allocation7], 4
      %s148 = int_to_ptr.vmem [resolvable:$true] %s147
      %s149 = sshll.u32 %s2, 4
      %s150 = int_to_ptr.hbm [resolvable:$true] %s149
      %155 = dma.vmem_to_hbm [thread:$0]  %s148, 256, %s150, [#allocation4], 64, 64, 4
    $region21: #{tpu_custom_call.1} parent=1 // pred_fallthru
      _
    // Predicated region
    $region22: #{tpu_custom_call.1} parent=1 // pred_check
      _
    $region23: #{tpu_custom_call.1} parent=1 // pred_check_branch
      %157 = sbr.rel (0) target = $region25
    $region24: #{tpu_custom_call.1} parent=1 // pred_region
      %159 = dma.done [#allocation4], 256
    $region25: #{tpu_custom_call.1} parent=1 // pred_fallthru
      _
    %160 = vsyncpa [#allocation3], 1
    %161 = vsyncpa [#allocation6], 1
    %162 = vsyncpa [#allocation4], 1

</llo_original>
